<compile_context>
chip_gen: v5e
topology: v5e:2x2
jax: 0.10.0
libtpu: 0.0.40
codegen_flags: <defaults>
</compile_context>

<pallas_src>
import functools

import jax
import jax.numpy as jnp
from jax import lax
from jax.experimental import pallas as pl
from jax.experimental.pallas import tpu as pltpu


def _cab_kernel(x_ref, w1_ref, w2_ref, o_ref, *, inv_hw):
    # x_ref block: (Bt, C, HW). Channels on sublanes, spatial on lanes.

    # ---- Squeeze: global average pool over spatial (lane) axis, f32 accum.
    pooled = jnp.sum(x_ref[...].astype(jnp.float32), axis=-1) * inv_hw     # (Bt, C)

    # ---- Excite: fc1 (no bias) + ReLU, fc2 (no bias) + sigmoid, all f32.
    z = lax.dot_general(pooled, w1_ref[...].astype(jnp.float32),
                        dimension_numbers=(((1,), (1,)), ((), ())),
                        preferred_element_type=jnp.float32)                # (Bt, hid)
    z = jnp.maximum(z, 0.0)
    g = lax.dot_general(z, w2_ref[...].astype(jnp.float32),
                        dimension_numbers=(((1,), (1,)), ((), ())),
                        preferred_element_type=jnp.float32)                # (Bt, C)
    g = jax.nn.sigmoid(g)

    # ---- Scale: re-read x (short live range) and gate in the input dtype.
    # Only the small (Bt, C) gate is cast; no full-tile f32 temporary.
    gate = g.astype(o_ref.dtype)[:, :, None]                               # (Bt, C, 1)
    o_ref[...] = (x_ref[...] * gate).astype(o_ref.dtype)


def _vmem_capacity_bytes():
    """Physical per-core VMEM; conservative fallback if the query fails."""
    try:
        info = pltpu.get_tpu_info()
        cap = getattr(info, "vmem_capacity_bytes", None)
        if cap:
            return int(cap)
    except Exception:
        pass
    return 64 << 20   # v7x per-TensorCore VMEM (smallest of the three gens)


def channel_attention_block(x_nchw, w1, w2, *, block_bytes_target=8 << 20):
    """x_nchw: (B, C, H, W); w1: (C//16, C); w2: (C, C//16)."""
    B, C, H, W = x_nchw.shape
    HW = H * W
    hid = w1.shape[0]

    # Flatten spatial dims only (contiguous merge -> free reshape, no HBM pass).
    # No padding / slicing: the kernel tolerates a ragged lane dim.
    x = x_nchw.reshape(B, C, HW)

    itemsize = jnp.dtype(x.dtype).itemsize
    per_img_bytes = C * HW * itemsize

    # ---- Generation-aware VMEM ceiling.
    vmem_cap = _vmem_capacity_bytes()
    vmem_ceiling = int(min(vmem_cap - (8 << 20), 112 << 20))

    # ---- Images per grid step (Bt): fill the block-byte target ...
    bt = max(1, int(block_bytes_target) // per_img_bytes)
    # ... but leave >= 4 grid steps (>= 2 for small B) so the pipeline
    # prologue/epilogue is hidden and both TensorCores get work, as long as
    # that keeps blocks >= ~1 MiB.
    steps_bt = max(1, B // 4) if B >= 4 else max(1, B // 2)
    if steps_bt < bt and steps_bt * per_img_bytes >= (1 << 20):
        bt = steps_bt
    Bt = min(bt, B)
    grid_b = int(pl.cdiv(B, Bt))          # ragged last batch block is fine

    # Prefer an even number of grid steps (v7x: two TCs share the batch axis).
    if grid_b > 1 and grid_b % 2 == 1:
        for cand in range(Bt - 1, 0, -1):
            if int(pl.cdiv(B, cand)) % 2 == 0:
                Bt = cand
                grid_b = int(pl.cdiv(B, cand))
                break

    # ---- VMEM budget: double-buffered in/out tiles + (double-buffered,
    # resident) weights + one f32-tile of headroom for in-kernel temporaries.
    block_bytes = Bt * per_img_bytes
    f32_tile_bytes = Bt * C * HW * 4
    weight_bytes = (w1.size * jnp.dtype(w1.dtype).itemsize
                    + w2.size * jnp.dtype(w2.dtype).itemsize)
    vmem_limit = 4 * block_bytes + f32_tile_bytes + 2 * weight_bytes + (2 << 20)
    vmem_limit = int(min(max(vmem_limit, 32 << 20), vmem_ceiling))

    out = pl.pallas_call(
        functools.partial(_cab_kernel, inv_hw=1.0 / HW),
        out_shape=jax.ShapeDtypeStruct((B, C, HW), x.dtype),
        grid_spec=pltpu.PrefetchScalarGridSpec(
            num_scalar_prefetch=0,
            grid=(grid_b,),
            in_specs=[
                pl.BlockSpec((Bt, C, HW), lambda b: (b, 0, 0)),
                pl.BlockSpec((hid, C), lambda b: (0, 0)),   # resident weights
                pl.BlockSpec((C, hid), lambda b: (0, 0)),
            ],
            out_specs=pl.BlockSpec((Bt, C, HW), lambda b: (b, 0, 0)),
        ),
        compiler_params=pltpu.CompilerParams(
            dimension_semantics=("parallel",),
            vmem_limit_bytes=vmem_limit),
    )(x, w1, w2)

    return out.reshape(B, C, H, W)


def _reference(x_nchw, w1, w2):
    # Pure-JAX reference mirroring the PyTorch forward.
    y = jnp.mean(x_nchw.astype(jnp.float32), axis=(2, 3))   # (B, C)
    y = jnp.maximum(y @ w1.T.astype(jnp.float32), 0.0)      # (B, C//16)
    y = jax.nn.sigmoid(y @ w2.T.astype(jnp.float32))        # (B, C)
    return (x_nchw.astype(jnp.float32) * y[:, :, None, None]).astype(x_nchw.dtype)


if __name__ == "__main__":
    key = jax.random.PRNGKey(0)

    def run_case(B, C, H, W, **kwargs):
        hid = C // 16
        kx, k1, k2 = jax.random.split(jax.random.fold_in(key, B * 10000 + H * 100 + W), 3)
        x = jax.random.normal(kx, (B, C, H, W), dtype=jnp.float32)
        # PyTorch nn.Linear weight shape = (out, in).
        w1 = jax.random.normal(k1, (hid, C), dtype=jnp.float32) * (1.0 / jnp.sqrt(C))
        w2 = jax.random.normal(k2, (C, hid), dtype=jnp.float32) * (1.0 / jnp.sqrt(hid))

        out = jax.block_until_ready(channel_attention_block(x, w1, w2, **kwargs))
        ref = _reference(x, w1, w2)
        assert jnp.allclose(out, ref, atol=1e-5, rtol=1e-5), \
            f"mismatch vs reference for shape {(B, C, H, W)}"

    # Lane-aligned spatial (HW = 256), unaligned spatial (HW = 196), and a
    # multi-step grid with a ragged last batch block + ragged lane dim.
    run_case(2, 32, 16, 16)
    run_case(2, 32, 14, 14)
    run_case(5, 32, 7, 9, block_bytes_target=32 << 10)

    print("KERNEL_OK")
</pallas_src>

<mosaic_0001>
module attributes {stable_mosaic.version = 11 : i64} {
  func.func @_cab_kernel(%arg0: i32, %arg1: memref<2x32x256xf32, #tpu.memory_space<vmem>>, %arg2: memref<2x32xf32, #tpu.memory_space<vmem>>, %arg3: memref<32x2xf32, #tpu.memory_space<vmem>>, %arg4: memref<2x32x256xf32, #tpu.memory_space<vmem>>) attributes {dimension_semantics = [#tpu.dimension_semantics<parallel>], iteration_bounds = array<i64: 1>, scalar_prefetch = 0 : i64, scratch_operands = 0 : i64, tpu.core_type = #tpu.core_type<tc>, window_params = [{transform_indices = @transform_0, window_bounds = array<i64: 2, 32, 256>}, {pipeline_mode = #tpu.pipeline_mode<synchronous>, transform_indices = @transform_1, window_bounds = array<i64: 2, 32>}, {pipeline_mode = #tpu.pipeline_mode<synchronous>, transform_indices = @transform_2, window_bounds = array<i64: 32, 2>}, {transform_indices = @transform_3, window_bounds = array<i64: 2, 32, 256>}]} {
    %c0 = arith.constant 0 : index
    %c0_0 = arith.constant 0 : index
    %c0_1 = arith.constant 0 : index
    %0 = vector.load %arg1[%c0, %c0_0, %c0_1] : memref<2x32x256xf32, #tpu.memory_space<vmem>>, vector<2x32x256xf32>
    %cst = arith.constant dense<0.000000e+00> : vector<2x32xf32>
    %1 = vector.multi_reduction <add>, %0, %cst [2] : vector<2x32x256xf32> to vector<2x32xf32>
    %cst_2 = arith.constant 3.906250e-03 : f32
    %2 = vector.broadcast %cst_2 : f32 to vector<2x32xf32>
    %3 = arith.mulf %1, %2 : vector<2x32xf32>
    %c0_3 = arith.constant 0 : index
    %c0_4 = arith.constant 0 : index
    %4 = vector.load %arg2[%c0_3, %c0_4] : memref<2x32xf32, #tpu.memory_space<vmem>>, vector<2x32xf32>
    %cst_5 = arith.constant dense<0.000000e+00> : vector<2x2xf32>
    %5 = tpu.matmul %3, %4, %cst_5 {dimension_numbers = #tpu.dot_dimension_numbers<[1], [1], [0], [0], [0, 0, 1, 0], [], []>} : vector<2x32xf32>, vector<2x32xf32>, vector<2x2xf32> -> vector<2x2xf32>
    %cst_6 = arith.constant 0.000000e+00 : f32
    %6 = vector.broadcast %cst_6 : f32 to vector<2x2xf32>
    %7 = arith.maximumf %5, %6 : vector<2x2xf32>
    %c0_7 = arith.constant 0 : index
    %c0_8 = arith.constant 0 : index
    %8 = vector.load %arg3[%c0_7, %c0_8] : memref<32x2xf32, #tpu.memory_space<vmem>>, vector<32x2xf32>
    %cst_9 = arith.constant dense<0.000000e+00> : vector<2x32xf32>
    %9 = tpu.matmul %7, %8, %cst_9 {dimension_numbers = #tpu.dot_dimension_numbers<[1], [1], [0], [0], [0, 0, 1, 0], [], []>} : vector<2x2xf32>, vector<32x2xf32>, vector<2x32xf32> -> vector<2x32xf32>
    %10 = arith.negf %9 : vector<2x32xf32>
    %11 = math.exp %10 : vector<2x32xf32>
    %cst_10 = arith.constant 1.000000e+00 : f32
    %12 = vector.broadcast %cst_10 : f32 to vector<2x32xf32>
    %13 = arith.addf %12, %11 : vector<2x32xf32>
    %14 = arith.divf %12, %13 : vector<2x32xf32>
    %15 = vector.shape_cast %14 : vector<2x32xf32> to vector<2x32x1xf32>
    %c0_11 = arith.constant 0 : index
    %c0_12 = arith.constant 0 : index
    %c0_13 = arith.constant 0 : index
    %16 = vector.load %arg1[%c0_11, %c0_12, %c0_13] : memref<2x32x256xf32, #tpu.memory_space<vmem>>, vector<2x32x256xf32>
    %17 = vector.broadcast %15 : vector<2x32x1xf32> to vector<2x32x256xf32>
    %18 = arith.mulf %16, %17 : vector<2x32x256xf32>
    %c0_14 = arith.constant 0 : index
    %c0_15 = arith.constant 0 : index
    %c0_16 = arith.constant 0 : index
    %19 = vector.load %arg4[%c0_14, %c0_15, %c0_16] : memref<2x32x256xf32, #tpu.memory_space<vmem>>, vector<2x32x256xf32>
    tpu.vector_store %arg4[%c0_14, %c0_15, %c0_16], %18 {strides = array<i32>} : memref<2x32x256xf32, #tpu.memory_space<vmem>>, vector<2x32x256xf32>,
    return
  }
  func.func @transform_0(%arg0: i32) -> (i32, i32, i32) {
    %c0_i32 = arith.constant 0 : i32
    %c0_i32_0 = arith.constant 0 : i32
    %c0_i32_1 = arith.constant 0 : i32
    return %arg0, %c0_i32, %c0_i32_0 : i32, i32, i32
  }
  func.func @transform_1(%arg0: i32) -> (i32, i32) {
    %c0_i32 = arith.constant 0 : i32
    %c0_i32_0 = arith.constant 0 : i32
    %c0_i32_1 = arith.constant 0 : i32
    return %c0_i32, %c0_i32_0 : i32, i32
  }
  func.func @transform_2(%arg0: i32) -> (i32, i32) {
    %c0_i32 = arith.constant 0 : i32
    %c0_i32_0 = arith.constant 0 : i32
    %c0_i32_1 = arith.constant 0 : i32
    return %c0_i32, %c0_i32_0 : i32, i32
  }
  func.func @transform_3(%arg0: i32) -> (i32, i32, i32) {
    %c0_i32 = arith.constant 0 : i32
    %c0_i32_0 = arith.constant 0 : i32
    %c0_i32_1 = arith.constant 0 : i32
    return %arg0, %c0_i32, %c0_i32_0 : i32, i32, i32
  }
}

</mosaic_0001>

<llo_original>
// kernel: tpu_custom_call.1
$region0: #{tpu_custom_call.1}
  #allocation0 [shape = 'u32[]', space=smem, size = 0x4, offset = 0x4, fixed_abs, tag = 'smem constant byte address 0x4 - core index']
  #allocation1 [shape = 'u32[72,128]{1,0:T(1,128)}', space=vmem, size = 0x9000, scoped, tag = 'internal scratch']
  %s0 = inlined_call_operand.hbm [shape: f32[2,32,256], index: 0, kind: input, shape index: {}]
  %s1 = inlined_call_operand.vmem [shape: f32[2,32], index: 1, kind: input, shape index: {}]
  %s2 = inlined_call_operand.vmem [shape: f32[32,2], index: 2, kind: input, shape index: {}]
  %s3 = inlined_call_operand.hbm [shape: f32[2,32,256], index: 3, kind: output, shape index: {}]
  %s4 = sld [smem:[#allocation0]]
  $region26: #{tpu_custom_call.1} parent=0
    _
  %s6 = ssub.s32 1, %s4
  %s7 = scalar_select 0, %s6, %s4
  $region1: #{tpu_custom_call.1} parent=0
    #allocation2 [shape = 'u8[65536]{0}', space=vmem, size = 0x10000, scoped, tag = 'input window, operand 0, single buffered']
    #allocation3 [shape = 's32[1]{0}', space=sflag, size = 0x4, scoped, tag = 'scoped memory for tpu_custom_call.1']
    #allocation4 [shape = 's32[1]{0}', space=sflag, size = 0x4, scoped, tag = 'scoped memory for tpu_custom_call.1']
    #allocation5 [shape = 'u8[65536]{0}', space=vmem, size = 0x10000, scoped, tag = 'output window, operand 0, single buffered']
    %8 = vsyncpa [#allocation3], 0
    %9 = vsyncpa [#allocation4], 0
    // Predicated region
    $region2: #{tpu_custom_call.1} parent=1 // pred_check
      _
    $region3: #{tpu_custom_call.1} parent=1 // pred_check_branch
      %11 = sbr.rel (0) target = $region5
    $region4: #{tpu_custom_call.1} parent=1 // pred_region
      %13 = vsyncadd [#allocation3], 0
      %s14 = sshll.u32 %s0, 4
      %s15 = int_to_ptr.hbm [resolvable:$true] %s14
      %s16 = sshll.u32 [#allocation2], 4
      %s17 = int_to_ptr.vmem [resolvable:$true] %s16
      %22 = dma.hbm_to_vmem [thread:$0]  %s15, 2048, %s17, [#allocation3], 256, 256, 16
    $region5: #{tpu_custom_call.1} parent=1 // pred_fallthru
      _
    // Predicated region
    $region6: #{tpu_custom_call.1} parent=1 // pred_check
      _
    $region7: #{tpu_custom_call.1} parent=1 // pred_check_branch
      %24 = sbr.rel (0) target = $region9
    $region8: #{tpu_custom_call.1} parent=1 // pred_region
      _
    $region9: #{tpu_custom_call.1} parent=1 // pred_fallthru
      _
    // Predicated region
    $region10: #{tpu_custom_call.1} parent=1 // pred_check
      _
    $region11: #{tpu_custom_call.1} parent=1 // pred_check_branch
      %26 = sbr.rel (0) target = $region13
    $region12: #{tpu_custom_call.1} parent=1 // pred_region
      _
    $region13: #{tpu_custom_call.1} parent=1 // pred_fallthru
      _
    // Predicated region
    $region14: #{tpu_custom_call.1} parent=1 // pred_check
      _
    $region15: #{tpu_custom_call.1} parent=1 // pred_check_branch
      %28 = sbr.rel (0) target = $region17
    $region16: #{tpu_custom_call.1} parent=1 // pred_region
      %30 = dma.done [#allocation3], 2048
    $region17: #{tpu_custom_call.1} parent=1 // pred_fallthru
      _
    %v31 = vld [vmem:[#allocation2] sm:$0xff]
    %v32 = vld [vmem:[#allocation2 + $0x8] sm:$0xff]
    %v33 = vld [vmem:[#allocation2 + $0x10] sm:$0xff]
    %v34 = vld [vmem:[#allocation2 + $0x18] sm:$0xff]
    %v35 = vld [vmem:[#allocation2 + $0x20] sm:$0xff]
    %v36 = vld [vmem:[#allocation2 + $0x28] sm:$0xff]
    %v37 = vld [vmem:[#allocation2 + $0x30] sm:$0xff]
    %v38 = vld [vmem:[#allocation2 + $0x38] sm:$0xff]
    %v39 = vld [vmem:[#allocation2 + $0x40] sm:$0xff]
    %v40 = vld [vmem:[#allocation2 + $0x48] sm:$0xff]
    %v41 = vld [vmem:[#allocation2 + $0x50] sm:$0xff]
    %v42 = vld [vmem:[#allocation2 + $0x58] sm:$0xff]
    %v43 = vld [vmem:[#allocation2 + $0x60] sm:$0xff]
    %v44 = vld [vmem:[#allocation2 + $0x68] sm:$0xff]
    %v45 = vld [vmem:[#allocation2 + $0x70] sm:$0xff]
    %v46 = vld [vmem:[#allocation2 + $0x78] sm:$0xff]
    %v47 = vadd.f32 %v31, %v32
    %48 = vadd.xlane.f32.xlu0 %v47
    %v49 = vpop.xlane.xlu0 %48
    %v50 = vadd.f32 %v33, %v34
    %51 = vadd.xlane.f32.xlu0 %v50
    %v52 = vpop.xlane.xlu0 %51
    %v53 = vadd.f32 %v35, %v36
    %54 = vadd.xlane.f32.xlu0 %v53
    %v55 = vpop.xlane.xlu0 %54
    %v56 = vadd.f32 %v37, %v38
    %57 = vadd.xlane.f32.xlu0 %v56
    %v58 = vpop.xlane.xlu0 %57
    %v59 = vadd.f32 %v39, %v40
    %60 = vadd.xlane.f32.xlu0 %v59
    %v61 = vpop.xlane.xlu0 %60
    %v62 = vadd.f32 %v41, %v42
    %63 = vadd.xlane.f32.xlu0 %v62
    %v64 = vpop.xlane.xlu0 %63
    %v65 = vadd.f32 %v43, %v44
    %66 = vadd.xlane.f32.xlu0 %v65
    %v67 = vpop.xlane.xlu0 %66
    %v68 = vadd.f32 %v45, %v46
    %69 = vadd.xlane.f32.xlu0 %v68
    %v70 = vpop.xlane.xlu0 %69
    %v71 = vmul.f32 %v49, 0.00390625
    %v72 = vmul.f32 %v52, 0.00390625
    %v73 = vmul.f32 %v55, 0.00390625
    %v74 = vmul.f32 %v58, 0.00390625
    %v75 = vmul.f32 %v61, 0.00390625
    %v76 = vmul.f32 %v64, 0.00390625
    %v77 = vmul.f32 %v67, 0.00390625
    %v78 = vmul.f32 %v70, 0.00390625
    %v79 = vld [vmem:[%s1] sm:$0x3]
    %v88 = vlaneseq
    %v89 = vand.u32 %v88, 127
    %v90 = vperm.slane %v71, %v89
    %v91 = vadd.s32 %v89, 4294967288
    %v92 = vperm.slane %v72, %v91
    %vm93 = vcmask 130112
    %v94 = vsel %vm93, %v92, %v90
    %v95 = vadd.s32 %v89, 4294967280
    %v96 = vperm.slane %v73, %v95
    %vm97 = vcmask 195712
    %v98 = vsel %vm97, %v96, %v94
    %v99 = vadd.s32 %v89, 4294967272
    %v100 = vperm.slane %v74, %v99
    %vm101 = vcmask 261312
    %v102 = vsel %vm101, %v100, %v98
    %v103 = vperm.slane %v75, %v89
    %v104 = vperm.slane %v76, %v91
    %v105 = vsel %vm93, %v104, %v103
    %v106 = vperm.slane %v77, %v95
    %v107 = vsel %vm97, %v106, %v105
    %v108 = vperm.slane %v78, %v99
    %v109 = vsel %vm101, %v108, %v107
    %vm110 = vcmask 1041409
    %v111 = vsel %vm110, %v109, %v102
    %vm112 = vcmask 261120
    %v113 = vsel %vm112, %v111, 0
    %v116 = vsel %vm112, %v79, 0
    %118 = vmatpush.xpose.msra.mxu0 0.0
    %119 = vmatpush.xpose.msra.mxu0 0.0
    %120 = vmatpush.xpose.msra.mxu0 0.0
    %121 = vmatpush.xpose.msra.mxu0 0.0
    %122 = vmatpush.xpose.msra.mxu0 0.0
    %123 = vmatpush.xpose.msra.mxu0 0.0
    %124 = vmatpush.xpose.msra.mxu0 0.0
    %125 = vmatpush.xpose.msra.mxu0 0.0
    %126 = vmatpush.xpose.msra.mxu0 0.0
    %127 = vmatpush.xpose.msra.mxu0 0.0
    %128 = vmatpush.xpose.msra.mxu0 0.0
    %129 = vmatpush.xpose.msra.mxu0 0.0
    %130 = vmatpush.xpose.msra.mxu0 0.0
    %131 = vmatpush.xpose.msra.mxu0 0.0
    %132 = vmatpush.xpose.msra.mxu0 0.0
    %133 = vmatpush.xpose.msra.mxu0 %v116
    %134 = vmatmul.f32.gmra.mxu0 %v113
    %v135 = vpop.f32.mrf.mxu0
    %v136 = vadd.f32 0.0, %v135
    %137 = vdwg.mxu0
    %v138 = vmax.f32 %v136, 0.0
    %v139 = vld [vmem:[%s2] sm:$0xff]
    %v140 = vld [vmem:[%s2 + $0x8] sm:$0xff]
    %v141 = vld [vmem:[%s2 + $0x10] sm:$0xff]
    %v142 = vld [vmem:[%s2 + $0x18] sm:$0xff]
    %vm143 = vcmask 15360
    %v145 = vsel %vm143, %v138, 0
    %v148 = vsel %vm143, %v139, 0
    %v151 = vsel %vm143, %v140, 0
    %v154 = vsel %vm143, %v141, 0
    %v157 = vsel %vm143, %v142, 0
    %159 = vmatpush.xpose.msra.mxu0 0.0
    %160 = vmatpush.xpose.msra.mxu0 0.0
    %161 = vmatpush.xpose.msra.mxu0 0.0
    %162 = vmatpush.xpose.msra.mxu0 0.0
    %163 = vmatpush.xpose.msra.mxu0 0.0
    %164 = vmatpush.xpose.msra.mxu0 0.0
    %165 = vmatpush.xpose.msra.mxu0 0.0
    %166 = vmatpush.xpose.msra.mxu0 0.0
    %167 = vmatpush.xpose.msra.mxu0 0.0
    %168 = vmatpush.xpose.msra.mxu0 0.0
    %169 = vmatpush.xpose.msra.mxu0 0.0
    %170 = vmatpush.xpose.msra.mxu0 0.0
    %171 = vmatpush.xpose.msra.mxu0 %v157
    %172 = vmatpush.xpose.msra.mxu0 %v154
    %173 = vmatpush.xpose.msra.mxu0 %v151
    %174 = vmatpush.xpose.msra.mxu0 %v148
    %175 = vmatmul.f32.gmra.mxu0 %v145
    %v176 = vpop.f32.mrf.mxu0
    %v177 = vadd.f32 0.0, %v176
    %178 = vdwg.mxu0
    %v179 = vxor.u32 %v177, 2147483648
    %v180 = vmul.f32 %v179, 1.442695
    %v181 = vpow.pop %v180
    %v182 = vadd.f32 %v181, 1.0
    %v183 = vrcp.pop %v182
    %v184 = vmul.f32 %v182, %v183
    %v185 = vsub.f32 1.0, %v184
    %v186 = vmul.f32 %v183, %v185
    %v187 = vadd.f32 %v183, %v186
    %vm188 = vweird.f32 %v182
    %vm189 = vweird.f32 %v183
    %vm190 = vmor %vm188, %vm189
    %v191 = vsel %vm190, %v183, %v187
    %v192 = vand.u32 2147483647, %v182
    %vm193 = vcmp.eq.f32.partialorder %v192, 8.507059e+37
    %v194 = vand.u32 %v182, 2147483648
    %v195 = vor.u32 1.1754944e-38, %v194
    %v196 = vsel %vm193, %v195, %v191
    %v197 = vmul.f32 1.0, %v196
    %v198 = vperm.slane %v197, 0
    %v199 = vlaneseq
    %v200 = vshrl.u32 %v199, 7
    %202 = vset.pattern.permute.xlu0 %v200
    %203 = vperm.xlu0 %202, %v198
    %v204 = vpop.permute.xlu0 %203
    %v205 = vlaneseq
    %v206 = vshrl.u32 %v205, 7
    %v207 = vadd.s32 %v206, 8
    %208 = vset.pattern.permute.xlu0 %v207
    %209 = vperm.xlu0 %208, %v198
    %v210 = vpop.permute.xlu0 %209
    %v211 = vlaneseq
    %v212 = vshrl.u32 %v211, 7
    %v213 = vadd.s32 %v212, 16
    %214 = vset.pattern.permute.xlu0 %v213
    %215 = vperm.xlu0 %214, %v198
    %v216 = vpop.permute.xlu0 %215
    %v217 = vlaneseq
    %v218 = vshrl.u32 %v217, 7
    %v219 = vadd.s32 %v218, 24
    %220 = vset.pattern.permute.xlu0 %v219
    %221 = vperm.xlu0 %220, %v198
    %v222 = vpop.permute.xlu0 %221
    %v223 = vperm.slane %v197, 1
    %v224 = vlaneseq
    %v225 = vshrl.u32 %v224, 7
    %227 = vset.pattern.permute.xlu0 %v225
    %228 = vperm.xlu0 %227, %v223
    %v229 = vpop.permute.xlu0 %228
    %v230 = vlaneseq
    %v231 = vshrl.u32 %v230, 7
    %v232 = vadd.s32 %v231, 8
    %233 = vset.pattern.permute.xlu0 %v232
    %234 = vperm.xlu0 %233, %v223
    %v235 = vpop.permute.xlu0 %234
    %v236 = vlaneseq
    %v237 = vshrl.u32 %v236, 7
    %v238 = vadd.s32 %v237, 16
    %239 = vset.pattern.permute.xlu0 %v238
    %240 = vperm.xlu0 %239, %v223
    %v241 = vpop.permute.xlu0 %240
    %v242 = vlaneseq
    %v243 = vshrl.u32 %v242, 7
    %v244 = vadd.s32 %v243, 24
    %245 = vset.pattern.permute.xlu0 %v244
    %246 = vperm.xlu0 %245, %v223
    %v247 = vpop.permute.xlu0 %246
    %v248 = vmul.f32 %v31, %v204
    %v249 = vmul.f32 %v32, %v204
    %v250 = vmul.f32 %v33, %v210
    %v251 = vmul.f32 %v34, %v210
    %v252 = vmul.f32 %v35, %v216
    %v253 = vmul.f32 %v36, %v216
    %v254 = vmul.f32 %v37, %v222
    %v255 = vmul.f32 %v38, %v222
    %v256 = vmul.f32 %v39, %v229
    %v257 = vmul.f32 %v40, %v229
    %v258 = vmul.f32 %v41, %v235
    %v259 = vmul.f32 %v42, %v235
    %v260 = vmul.f32 %v43, %v241
    %v261 = vmul.f32 %v44, %v241
    %v262 = vmul.f32 %v45, %v247
    %v263 = vmul.f32 %v46, %v247
    %264 = vst [vmem:[#allocation5] sm:$0xff] %v248
    %265 = vst [vmem:[#allocation5 + $0x8] sm:$0xff] %v249
    %266 = vst [vmem:[#allocation5 + $0x10] sm:$0xff] %v250
    %267 = vst [vmem:[#allocation5 + $0x18] sm:$0xff] %v251
    %268 = vst [vmem:[#allocation5 + $0x20] sm:$0xff] %v252
    %269 = vst [vmem:[#allocation5 + $0x28] sm:$0xff] %v253
    %270 = vst [vmem:[#allocation5 + $0x30] sm:$0xff] %v254
    %271 = vst [vmem:[#allocation5 + $0x38] sm:$0xff] %v255
    %272 = vst [vmem:[#allocation5 + $0x40] sm:$0xff] %v256
    %273 = vst [vmem:[#allocation5 + $0x48] sm:$0xff] %v257
    %274 = vst [vmem:[#allocation5 + $0x50] sm:$0xff] %v258
    %275 = vst [vmem:[#allocation5 + $0x58] sm:$0xff] %v259
    %276 = vst [vmem:[#allocation5 + $0x60] sm:$0xff] %v260
    %277 = vst [vmem:[#allocation5 + $0x68] sm:$0xff] %v261
    %278 = vst [vmem:[#allocation5 + $0x70] sm:$0xff] %v262
    %279 = vst [vmem:[#allocation5 + $0x78] sm:$0xff] %v263
    // Predicated region
    $region18: #{tpu_custom_call.1} parent=1 // pred_check
      _
    $region19: #{tpu_custom_call.1} parent=1 // pred_check_branch
      %281 = sbr.rel (0) target = $region21
    $region20: #{tpu_custom_call.1} parent=1 // pred_region
      %283 = vsyncadd [#allocation4], 0
      %s284 = sshll.u32 [#allocation5], 4
      %s285 = int_to_ptr.vmem [resolvable:$true] %s284
      %s286 = sshll.u32 %s3, 4
      %s287 = int_to_ptr.hbm [resolvable:$true] %s286
      %292 = dma.vmem_to_hbm [thread:$0]  %s285, 2048, %s287, [#allocation4], 256, 256, 16
    $region21: #{tpu_custom_call.1} parent=1 // pred_fallthru
      _
    // Predicated region
    $region22: #{tpu_custom_call.1} parent=1 // pred_check
      _
    $region23: #{tpu_custom_call.1} parent=1 // pred_check_branch
      %294 = sbr.rel (0) target = $region25
    $region24: #{tpu_custom_call.1} parent=1 // pred_region
      %296 = dma.done [#allocation4], 2048
    $region25: #{tpu_custom_call.1} parent=1 // pred_fallthru
      _
    %297 = vsyncpa [#allocation3], 1
    %298 = vsyncpa [#allocation4], 1

</llo_original>
